<compile_context>
chip_gen: v7x
topology: tpu7x:2x2x1
jax: 0.10.0
libtpu: 0.0.40
codegen_flags: <defaults>
</compile_context>

<pallas_src>
import jax
import jax.numpy as jnp
from jax.experimental import pallas as pl
from jax.experimental.pallas import tpu as pltpu

EPS = 1e-5  # nn.BatchNorm2d default eps


def _round_up(x, m):
    return (x + m - 1) // m * m


def conv_stats_kernel(p_ref, w_ref, y_ref, sum_ref, sq_ref):
    """p: (TM, Kp) im2col rows, w: (Kp, Cp).
    Writes conv tile y (TM, Cp) and per-tile per-channel sum / sumsq (f32)."""
    y = jnp.dot(p_ref[...], w_ref[...], preferred_element_type=jnp.float32)
    y_ref[...] = y.astype(y_ref.dtype)
    sum_ref[...] = jnp.sum(y, axis=0).reshape(1, 1, -1)
    sq_ref[...] = jnp.sum(y * y, axis=0).reshape(1, 1, -1)


def bn_apply_kernel(y_ref, s_ref, t_ref, o_ref):
    """Single fused FMA epilogue: out = y * s + t (per-channel s, t)."""
    y = y_ref[...].astype(jnp.float32)
    o_ref[...] = (y * s_ref[...] + t_ref[...]).astype(o_ref.dtype)


def conv_block_forward(x_nchw, weight_oihw, bias, gamma, beta,
                       *, stride=1, padding=1, with_bn=True, row_tile=512):
    """ConvBlock forward. x: (N, Cin, H, W) NCHW -> (N, Cout, Ho, Wo) NCHW.

    row_tile: rows of conv output per grid step. 512-1024 works well on v6e
    (128 MiB VMEM); use 256-512 on v7x (64 MiB VMEM) for large Kp/Cp."""
    N, Cin, H, W = x_nchw.shape
    Cout, _, KH, KW = weight_oihw.shape
    Ho = (H + 2 * padding - KH) // stride + 1
    Wo = (W + 2 * padding - KW) // stride + 1
    dtype = x_nchw.dtype

    # --- wrapper-side layout + im2col (single XLA pass; kernels see plain
    #     lane-dense (rows, K) matrices). A real model would stay NHWC. ---
    x_nhwc = jnp.transpose(x_nchw, (0, 2, 3, 1))
    xp = jnp.pad(x_nhwc, ((0, 0), (padding, padding), (padding, padding), (0, 0)))
    patches = jnp.concatenate(
        [xp[:, kh:kh + (Ho - 1) * stride + 1:stride,
             kw:kw + (Wo - 1) * stride + 1:stride, :]
         for kh in range(KH) for kw in range(KW)],
        axis=-1).reshape(N * Ho * Wo, KH * KW * Cin)
    w = jnp.transpose(weight_oihw, (2, 3, 1, 0)).reshape(KH * KW * Cin, Cout)

    # --- pad to lane-dense / tile-aligned shapes (zero padding is exact) ---
    M = N * Ho * Wo
    K = KH * KW * Cin
    Kp = _round_up(K, 128)
    Cp = _round_up(Cout, 128)
    TM = row_tile if M >= row_tile else _round_up(M, 8)
    Mp = _round_up(M, TM)
    grid = (Mp // TM,)

    patches_p = jnp.pad(patches, ((0, Mp - M), (0, Kp - K))).astype(dtype)
    w_p = jnp.pad(w, ((0, Kp - K), (0, Cp - Cout))).astype(dtype)

    cparams = pltpu.CompilerParams(
        dimension_semantics=("parallel",),          # shards across TCs on v7x
        vmem_limit_bytes=32 * 1024 * 1024)

    # --- pass 1: conv tiles + per-tile per-channel sum / sumsq partials ---
    y, psum, psq = pl.pallas_call(
        conv_stats_kernel,
        grid=grid,
        in_specs=[pl.BlockSpec((TM, Kp), lambda i: (i, 0)),
                  pl.BlockSpec((Kp, Cp), lambda i: (0, 0))],
        out_specs=[pl.BlockSpec((TM, Cp), lambda i: (i, 0)),
                   pl.BlockSpec((1, 1, Cp), lambda i: (i, 0, 0)),
                   pl.BlockSpec((1, 1, Cp), lambda i: (i, 0, 0))],
        out_shape=(jax.ShapeDtypeStruct((Mp, Cp), dtype),
                   jax.ShapeDtypeStruct((grid[0], 1, Cp), jnp.float32),
                   jax.ShapeDtypeStruct((grid[0], 1, Cp), jnp.float32)),
        compiler_params=cparams,
    )(patches_p, w_p)

    # --- tiny host-side (XLA) reduction of partials -> per-channel s, t ---
    # Padded rows are all-zero so they contribute nothing; divide by real M.
    if with_bn:
        count = jnp.float32(M)
        mean = psum.sum(axis=(0, 1)) / count                      # (Cp,)
        var = jnp.maximum(psq.sum(axis=(0, 1)) / count - mean * mean, 0.0)
        gamma_p = jnp.pad(gamma.astype(jnp.float32), (0, Cp - Cout))
        beta_p = jnp.pad(beta.astype(jnp.float32), (0, Cp - Cout))
        s = gamma_p * jax.lax.rsqrt(var + EPS)
        # conv bias is constant per channel -> exactly cancelled by (y - mean)
        t = beta_p - mean * s
    else:
        s = jnp.ones((Cp,), jnp.float32)
        t = jnp.pad(bias.astype(jnp.float32), (0, Cp - Cout))

    # --- pass 2: lane-dense fused BN / bias epilogue ---
    out_flat = pl.pallas_call(
        bn_apply_kernel,
        grid=grid,
        in_specs=[pl.BlockSpec((TM, Cp), lambda i: (i, 0)),
                  pl.BlockSpec((1, Cp), lambda i: (0, 0)),
                  pl.BlockSpec((1, Cp), lambda i: (0, 0))],
        out_specs=pl.BlockSpec((TM, Cp), lambda i: (i, 0)),
        out_shape=jax.ShapeDtypeStruct((Mp, Cp), dtype),
        compiler_params=cparams,
    )(y, s.reshape(1, Cp), t.reshape(1, Cp))

    out = out_flat[:M, :Cout].reshape(N, Ho, Wo, Cout)
    return jnp.transpose(out, (0, 3, 1, 2))


def reference_forward(x_nchw, weight_oihw, bias, gamma, beta,
                      stride=1, padding=1):
    y = jax.lax.conv_general_dilated(
        x_nchw, weight_oihw, window_strides=(stride, stride),
        padding=((padding, padding), (padding, padding)),
        dimension_numbers=("NCHW", "OIHW", "NCHW"))
    y = y + bias[None, :, None, None]
    mean = y.mean(axis=(0, 2, 3), keepdims=True)
    var = y.var(axis=(0, 2, 3), keepdims=True)  # biased, like PyTorch BN fwd
    y = (y - mean) * jax.lax.rsqrt(var + EPS)
    return y * gamma[None, :, None, None] + beta[None, :, None, None]


if __name__ == "__main__":
    key = jax.random.PRNGKey(0)
    k_x, k_w, k_b = jax.random.split(key, 3)

    N, Cin, H, W = 2, 4, 16, 16
    Cout, KH, KW = 8, 3, 3

    x = jax.random.normal(k_x, (N, Cin, H, W), dtype=jnp.float32)

    # Deterministic conv params (PyTorch-style uniform fan-in init).
    bound = 1.0 / (Cin * KH * KW) ** 0.5
    weight = jax.random.uniform(k_w, (Cout, Cin, KH, KW),
                                minval=-bound, maxval=bound, dtype=jnp.float32)
    bias = jax.random.uniform(k_b, (Cout,),
                              minval=-bound, maxval=bound, dtype=jnp.float32)
    # BN affine params as initialized in the module: weight=1, bias=0.
    gamma = jnp.ones((Cout,), jnp.float32)
    beta = jnp.zeros((Cout,), jnp.float32)

    out = conv_block_forward(x, weight, bias, gamma, beta,
                             stride=1, padding=1)
    out = jax.block_until_ready(out)

    ref = reference_forward(x, weight, bias, gamma, beta)
    assert out.shape == (N, Cout, H, W), out.shape
    assert jnp.allclose(out, ref, rtol=1e-3, atol=1e-3), float(
        jnp.max(jnp.abs(out - ref)))

    print("KERNEL_OK")
</pallas_src>

<mosaic_0001>
module attributes {stable_mosaic.version = 11 : i64} {
  func.func @conv_stats_kernel(%arg0: i32, %arg1: memref<512x128xf32, #tpu.memory_space<vmem>>, %arg2: memref<128x128xf32, #tpu.memory_space<vmem>>, %arg3: memref<512x128xf32, #tpu.memory_space<vmem>>, %arg4: memref<1x1x128xf32, #tpu.memory_space<vmem>>, %arg5: memref<1x1x128xf32, #tpu.memory_space<vmem>>) attributes {dimension_semantics = [#tpu.dimension_semantics<parallel>], iteration_bounds = array<i64: 1>, scalar_prefetch = 0 : i64, scratch_operands = 0 : i64, tpu.core_type = #tpu.core_type<tc>, window_params = [{transform_indices = @transform_0, window_bounds = array<i64: 512, 128>}, {pipeline_mode = #tpu.pipeline_mode<synchronous>, transform_indices = @transform_1, window_bounds = array<i64: 128, 128>}, {transform_indices = @transform_2, window_bounds = array<i64: 512, 128>}, {transform_indices = @transform_3, window_bounds = array<i64: 1, 1, 128>}, {transform_indices = @transform_4, window_bounds = array<i64: 1, 1, 128>}]} {
    %c0 = arith.constant 0 : index
    %c0_0 = arith.constant 0 : index
    %0 = vector.load %arg1[%c0, %c0_0] : memref<512x128xf32, #tpu.memory_space<vmem>>, vector<512x128xf32>
    %c0_1 = arith.constant 0 : index
    %c0_2 = arith.constant 0 : index
    %1 = vector.load %arg2[%c0_1, %c0_2] : memref<128x128xf32, #tpu.memory_space<vmem>>, vector<128x128xf32>
    %cst = arith.constant dense<0.000000e+00> : vector<512x128xf32>
    %2 = tpu.matmul %0, %1, %cst {dimension_numbers = #tpu.dot_dimension_numbers<[1], [0], [0], [1], [0, 0, 1, 1], [], []>} : vector<512x128xf32>, vector<128x128xf32>, vector<512x128xf32> -> vector<512x128xf32>
    %c0_3 = arith.constant 0 : index
    %c0_4 = arith.constant 0 : index
    %3 = vector.load %arg3[%c0_3, %c0_4] : memref<512x128xf32, #tpu.memory_space<vmem>>, vector<512x128xf32>
    tpu.vector_store %arg3[%c0_3, %c0_4], %2 {strides = array<i32>} : memref<512x128xf32, #tpu.memory_space<vmem>>, vector<512x128xf32>,
    %cst_5 = arith.constant dense<0.000000e+00> : vector<128xf32>
    %4 = vector.multi_reduction <add>, %2, %cst_5 [0] : vector<512x128xf32> to vector<128xf32>
    %5 = vector.shape_cast %4 : vector<128xf32> to vector<1x1x128xf32>
    %c0_6 = arith.constant 0 : index
    %c0_7 = arith.constant 0 : index
    %c0_8 = arith.constant 0 : index
    %6 = vector.load %arg4[%c0_6, %c0_7, %c0_8] : memref<1x1x128xf32, #tpu.memory_space<vmem>>, vector<1x1x128xf32>
    tpu.vector_store %arg4[%c0_6, %c0_7, %c0_8], %5 {strides = array<i32>} : memref<1x1x128xf32, #tpu.memory_space<vmem>>, vector<1x1x128xf32>,
    %7 = arith.mulf %2, %2 : vector<512x128xf32>
    %cst_9 = arith.constant dense<0.000000e+00> : vector<128xf32>
    %8 = vector.multi_reduction <add>, %7, %cst_9 [0] : vector<512x128xf32> to vector<128xf32>
    %9 = vector.shape_cast %8 : vector<128xf32> to vector<1x1x128xf32>
    %c0_10 = arith.constant 0 : index
    %c0_11 = arith.constant 0 : index
    %c0_12 = arith.constant 0 : index
    %10 = vector.load %arg5[%c0_10, %c0_11, %c0_12] : memref<1x1x128xf32, #tpu.memory_space<vmem>>, vector<1x1x128xf32>
    tpu.vector_store %arg5[%c0_10, %c0_11, %c0_12], %9 {strides = array<i32>} : memref<1x1x128xf32, #tpu.memory_space<vmem>>, vector<1x1x128xf32>,
    return
  }
  func.func @transform_0(%arg0: i32) -> (i32, i32) {
    %c0_i32 = arith.constant 0 : i32
    %c0_i32_0 = arith.constant 0 : i32
    return %arg0, %c0_i32 : i32, i32
  }
  func.func @transform_1(%arg0: i32) -> (i32, i32) {
    %c0_i32 = arith.constant 0 : i32
    %c0_i32_0 = arith.constant 0 : i32
    %c0_i32_1 = arith.constant 0 : i32
    return %c0_i32, %c0_i32_0 : i32, i32
  }
  func.func @transform_2(%arg0: i32) -> (i32, i32) {
    %c0_i32 = arith.constant 0 : i32
    %c0_i32_0 = arith.constant 0 : i32
    return %arg0, %c0_i32 : i32, i32
  }
  func.func @transform_3(%arg0: i32) -> (i32, i32, i32) {
    %c0_i32 = arith.constant 0 : i32
    %c0_i32_0 = arith.constant 0 : i32
    %c0_i32_1 = arith.constant 0 : i32
    return %arg0, %c0_i32, %c0_i32_0 : i32, i32, i32
  }
  func.func @transform_4(%arg0: i32) -> (i32, i32, i32) {
    %c0_i32 = arith.constant 0 : i32
    %c0_i32_0 = arith.constant 0 : i32
    %c0_i32_1 = arith.constant 0 : i32
    return %arg0, %c0_i32, %c0_i32_0 : i32, i32, i32
  }
}

</mosaic_0001>

<llo_original>
// kernel: tpu_custom_call.1
$region0: #{tpu_custom_call.1}
  #allocation0 [shape = 'u32[]', space=smem, size = 0x4, offset = 0x4, fixed_abs, tag = 'smem constant byte address 0x4 - core index']
  #allocation1 [shape = 'u32[144,128]{1,0:T(1,128)}', space=vmem, size = 0x12000, scoped, tag = 'internal scratch']
  %s0 = inlined_call_operand.hbm [shape: f32[512,128], index: 0, kind: input, shape index: {}]
  %s1 = inlined_call_operand.hbm [shape: f32[128,128], index: 1, kind: input, shape index: {}]
  %s2 = inlined_call_operand.hbm [shape: f32[512,128], index: 2, kind: output, shape index: {0}]
  %s3 = inlined_call_operand.hbm [shape: f32[1,1,128], index: 3, kind: output, shape index: {1}]
  %s4 = inlined_call_operand.hbm [shape: f32[1,1,128], index: 4, kind: output, shape index: {2}]
  %5 = xla_tuple %s2, %s3, %s4
  %s6 = sld [smem:[#allocation0]]
  $region42: #{tpu_custom_call.1} parent=0
    _
  %s8 = ssub.s32 1, %s6
  %s9 = scalar_select 0, %s8, %s6
  $region1: #{tpu_custom_call.1} parent=0
    #allocation2 [shape = 'u8[262144]{0}', space=vmem, size = 0x40000, scoped, tag = 'input window, operand 0, single buffered']
    #allocation3 [shape = 's32[1]{0}', space=sflag, size = 0x4, scoped, tag = 'scoped memory for tpu_custom_call.1']
    #allocation4 [shape = 's32[1]{0}', space=sflag, size = 0x4, scoped, tag = 'scoped memory for tpu_custom_call.1']
    #allocation5 [shape = 'u8[65536]{0}', space=vmem, size = 0x10000, scoped, tag = 'input window, operand 1, single buffered']
    #allocation6 [shape = 's32[1]{0}', space=sflag, size = 0x4, scoped, tag = 'scoped memory for tpu_custom_call.1']
    #allocation7 [shape = 'u8[262144]{0}', space=vmem, size = 0x40000, scoped, tag = 'output window, operand 0, single buffered']
    #allocation8 [shape = 'u8[512]{0}', space=vmem, size = 0x400, scoped, tag = 'output window, operand 1, single buffered']
    #allocation9 [shape = 's32[1]{0}', space=sflag, size = 0x4, scoped, tag = 'scoped memory for tpu_custom_call.1']
    #allocation10 [shape = 'u8[512]{0}', space=vmem, size = 0x400, scoped, tag = 'output window, operand 2, single buffered']
    %10 = vsyncpa [#allocation3], 0
    %11 = vsyncpa [#allocation6], 0
    %12 = vsyncpa [#allocation4], 0
    %13 = vsyncpa [#allocation9], 0
    // Predicated region
    $region2: #{tpu_custom_call.1} parent=1 // pred_check
      _
    $region3: #{tpu_custom_call.1} parent=1 // pred_check_branch
      %15 = sbr.rel (0) target = $region5
    $region4: #{tpu_custom_call.1} parent=1 // pred_region
      %s17 = ssub.s32 8192, 8192
      %18 = vsyncadd [#allocation3], %s17
      %s19 = sshll.u32 [#allocation2], 4
      %s20 = int_to_ptr.vmem [resolvable:$true] %s19
      %25 = dma.hbm_to_vmem [thread:$0]  %s0, 8192, %s20, [#allocation3], 128, 128, 8
    $region5: #{tpu_custom_call.1} parent=1 // pred_fallthru
      _
    // Predicated region
    $region6: #{tpu_custom_call.1} parent=1 // pred_check
      _
    $region7: #{tpu_custom_call.1} parent=1 // pred_check_branch
      %27 = sbr.rel (0) target = $region9
    $region8: #{tpu_custom_call.1} parent=1 // pred_region
      %s29 = ssub.s32 2048, 2048
      %30 = vsyncadd [#allocation6], %s29
      %s31 = sshll.u32 [#allocation5], 4
      %s32 = int_to_ptr.vmem [resolvable:$true] %s31
      %37 = dma.hbm_to_vmem [thread:$0]  %s1, 2048, %s32, [#allocation6], 128, 128, 8
    $region9: #{tpu_custom_call.1} parent=1 // pred_fallthru
      _
    // Predicated region
    $region10: #{tpu_custom_call.1} parent=1 // pred_check
      _
    $region11: #{tpu_custom_call.1} parent=1 // pred_check_branch
      %39 = sbr.rel (0) target = $region13
    $region12: #{tpu_custom_call.1} parent=1 // pred_region
      %40 = dma.done [#allocation3], 8192
    $region13: #{tpu_custom_call.1} parent=1 // pred_fallthru
      _
    // Predicated region
    $region14: #{tpu_custom_call.1} parent=1 // pred_check
      _
    $region15: #{tpu_custom_call.1} parent=1 // pred_check_branch
      %42 = sbr.rel (0) target = $region17
    $region16: #{tpu_custom_call.1} parent=1 // pred_region
      %43 = dma.done [#allocation6], 2048
    $region17: #{tpu_custom_call.1} parent=1 // pred_fallthru
      _
    %v44 = vld [vmem:[#allocation2] sm:$0xff]
    %v45 = vld [vmem:[#allocation2 + $0x8] sm:$0xff]
    %v46 = vld [vmem:[#allocation2 + $0x10] sm:$0xff]
    %v47 = vld [vmem:[#allocation2 + $0x18] sm:$0xff]
    %v48 = vld [vmem:[#allocation2 + $0x20] sm:$0xff]
    %v49 = vld [vmem:[#allocation2 + $0x28] sm:$0xff]
    %v50 = vld [vmem:[#allocation2 + $0x30] sm:$0xff]
    %v51 = vld [vmem:[#allocation2 + $0x38] sm:$0xff]
    %v52 = vld [vmem:[#allocation2 + $0x40] sm:$0xff]
    %v53 = vld [vmem:[#allocation2 + $0x48] sm:$0xff]
    %v54 = vld [vmem:[#allocation2 + $0x50] sm:$0xff]
    %v55 = vld [vmem:[#allocation2 + $0x58] sm:$0xff]
    %v56 = vld [vmem:[#allocation2 + $0x60] sm:$0xff]
    %v57 = vld [vmem:[#allocation2 + $0x68] sm:$0xff]
    %v58 = vld [vmem:[#allocation2 + $0x70] sm:$0xff]
    %v59 = vld [vmem:[#allocation2 + $0x78] sm:$0xff]
    %v60 = vld [vmem:[#allocation2 + $0x80] sm:$0xff]
    %v61 = vld [vmem:[#allocation2 + $0x88] sm:$0xff]
    %v62 = vld [vmem:[#allocation2 + $0x90] sm:$0xff]
    %v63 = vld [vmem:[#allocation2 + $0x98] sm:$0xff]
    %v64 = vld [vmem:[#allocation2 + $0xa0] sm:$0xff]
    %v65 = vld [vmem:[#allocation2 + $0xa8] sm:$0xff]
    %v66 = vld [vmem:[#allocation2 + $0xb0] sm:$0xff]
    %v67 = vld [vmem:[#allocation2 + $0xb8] sm:$0xff]
    %v68 = vld [vmem:[#allocation2 + $0xc0] sm:$0xff]
    %v69 = vld [vmem:[#allocation2 + $0xc8] sm:$0xff]
    %v70 = vld [vmem:[#allocation2 + $0xd0] sm:$0xff]
    %v71 = vld [vmem:[#allocation2 + $0xd8] sm:$0xff]
    %v72 = vld [vmem:[#allocation2 + $0xe0] sm:$0xff]
    %v73 = vld [vmem:[#allocation2 + $0xe8] sm:$0xff]
    %v74 = vld [vmem:[#allocation2 + $0xf0] sm:$0xff]
    %v75 = vld [vmem:[#allocation2 + $0xf8] sm:$0xff]
    %v76 = vld [vmem:[#allocation2 + $0x100] sm:$0xff]
    %v77 = vld [vmem:[#allocation2 + $0x108] sm:$0xff]
    %v78 = vld [vmem:[#allocation2 + $0x110] sm:$0xff]
    %v79 = vld [vmem:[#allocation2 + $0x118] sm:$0xff]
    %v80 = vld [vmem:[#allocation2 + $0x120] sm:$0xff]
    %v81 = vld [vmem:[#allocation2 + $0x128] sm:$0xff]
    %v82 = vld [vmem:[#allocation2 + $0x130] sm:$0xff]
    %v83 = vld [vmem:[#allocation2 + $0x138] sm:$0xff]
    %v84 = vld [vmem:[#allocation2 + $0x140] sm:$0xff]
    %v85 = vld [vmem:[#allocation2 + $0x148] sm:$0xff]
    %v86 = vld [vmem:[#allocation2 + $0x150] sm:$0xff]
    %v87 = vld [vmem:[#allocation2 + $0x158] sm:$0xff]
    %v88 = vld [vmem:[#allocation2 + $0x160] sm:$0xff]
    %v89 = vld [vmem:[#allocation2 + $0x168] sm:$0xff]
    %v90 = vld [vmem:[#allocation2 + $0x170] sm:$0xff]
    %v91 = vld [vmem:[#allocation2 + $0x178] sm:$0xff]
    %v92 = vld [vmem:[#allocation2 + $0x180] sm:$0xff]
    %v93 = vld [vmem:[#allocation2 + $0x188] sm:$0xff]
    %v94 = vld [vmem:[#allocation2 + $0x190] sm:$0xff]
    %v95 = vld [vmem:[#allocation2 + $0x198] sm:$0xff]
    %v96 = vld [vmem:[#allocation2 + $0x1a0] sm:$0xff]
    %v97 = vld [vmem:[#allocation2 + $0x1a8] sm:$0xff]
    %v98 = vld [vmem:[#allocation2 + $0x1b0] sm:$0xff]
    %v99 = vld [vmem:[#allocation2 + $0x1b8] sm:$0xff]
    %v100 = vld [vmem:[#allocation2 + $0x1c0] sm:$0xff]
    %v101 = vld [vmem:[#allocation2 + $0x1c8] sm:$0xff]
    %v102 = vld [vmem:[#allocation2 + $0x1d0] sm:$0xff]
    %v103 = vld [vmem:[#allocation2 + $0x1d8] sm:$0xff]
    %v104 = vld [vmem:[#allocation2 + $0x1e0] sm:$0xff]
    %v105 = vld [vmem:[#allocation2 + $0x1e8] sm:$0xff]
    %v106 = vld [vmem:[#allocation2 + $0x1f0] sm:$0xff]
    %v107 = vld [vmem:[#allocation2 + $0x1f8] sm:$0xff]
    %v108 = vld [vmem:[#allocation5] sm:$0xff]
    %v109 = vld [vmem:[#allocation5 + $0x8] sm:$0xff]
    %v110 = vld [vmem:[#allocation5 + $0x10] sm:$0xff]
    %v111 = vld [vmem:[#allocation5 + $0x18] sm:$0xff]
    %v112 = vld [vmem:[#allocation5 + $0x20] sm:$0xff]
    %v113 = vld [vmem:[#allocation5 + $0x28] sm:$0xff]
    %v114 = vld [vmem:[#allocation5 + $0x30] sm:$0xff]
    %v115 = vld [vmem:[#allocation5 + $0x38] sm:$0xff]
    %v116 = vld [vmem:[#allocation5 + $0x40] sm:$0xff]
    %v117 = vld [vmem:[#allocation5 + $0x48] sm:$0xff]
    %v118 = vld [vmem:[#allocation5 + $0x50] sm:$0xff]
    %v119 = vld [vmem:[#allocation5 + $0x58] sm:$0xff]
    %v120 = vld [vmem:[#allocation5 + $0x60] sm:$0xff]
    %v121 = vld [vmem:[#allocation5 + $0x68] sm:$0xff]
    %v122 = vld [vmem:[#allocation5 + $0x70] sm:$0xff]
    %v123 = vld [vmem:[#allocation5 + $0x78] sm:$0xff]
    %124 = vmatprep.subr.mxu0 0.0
    %125 = vmatpush1.msra.mxu0 %v108
    %126 = vmatprep.subr.mxu0 0.0
    %127 = vmatpush1.msra.mxu0 %v109
    %128 = vmatprep.subr.mxu0 0.0
    %129 = vmatpush1.msra.mxu0 %v110
    %130 = vmatprep.subr.mxu0 0.0
    %131 = vmatpush1.msra.mxu0 %v111
    %132 = vmatprep.subr.mxu0 0.0
    %133 = vmatpush1.msra.mxu0 %v112
    %134 = vmatprep.subr.mxu0 0.0
    %135 = vmatpush1.msra.mxu0 %v113
    %136 = vmatprep.subr.mxu0 0.0
    %137 = vmatpush1.msra.mxu0 %v114
    %138 = vmatprep.subr.mxu0 0.0
    %139 = vmatpush1.msra.mxu0 %v115
    %140 = vmatprep.subr.mxu0 0.0
    %141 = vmatpush1.msra.mxu0 %v116
    %142 = vmatprep.subr.mxu0 0.0
    %143 = vmatpush1.msra.mxu0 %v117
    %144 = vmatprep.subr.mxu0 0.0
    %145 = vmatpush1.msra.mxu0 %v118
    %146 = vmatprep.subr.mxu0 0.0
    %147 = vmatpush1.msra.mxu0 %v119
    %148 = vmatprep.subr.mxu0 0.0
    %149 = vmatpush1.msra.mxu0 %v120
    %150 = vmatprep.subr.mxu0 0.0
    %151 = vmatpush1.msra.mxu0 %v121
    %152 = vmatprep.subr.mxu0 0.0
    %153 = vmatpush1.msra.mxu0 %v122
    %154 = vmatprep.subr.mxu0 0.0
    %155 = vmatpush1.msra.mxu0 %v123
    %156 = vmatprep.subr.mxu0 0.0
    %157 = vmatpush1.msra.mxu0 0.0
    %158 = vmatprep.subr.mxu0 0.0
    %159 = vmatpush1.msra.mxu0 0.0
    %160 = vmatprep.subr.mxu0 0.0
    %161 = vmatpush1.msra.mxu0 0.0
    %162 = vmatprep.subr.mxu0 0.0
    %163 = vmatpush1.msra.mxu0 0.0
    %164 = vmatprep.subr.mxu0 0.0
    %165 = vmatpush1.msra.mxu0 0.0
    %166 = vmatprep.subr.mxu0 0.0
    %167 = vmatpush1.msra.mxu0 0.0
    %168 = vmatprep.subr.mxu0 0.0
    %169 = vmatpush1.msra.mxu0 0.0
    %170 = vmatprep.subr.mxu0 0.0
    %171 = vmatpush1.msra.mxu0 0.0
    %172 = vmatprep.subr.mxu0 0.0
    %173 = vmatpush1.msra.mxu0 0.0
    %174 = vmatprep.subr.mxu0 0.0
    %175 = vmatpush1.msra.mxu0 0.0
    %176 = vmatprep.subr.mxu0 0.0
    %177 = vmatpush1.msra.mxu0 0.0
    %178 = vmatprep.subr.mxu0 0.0
    %179 = vmatpush1.msra.mxu0 0.0
    %180 = vmatprep.subr.mxu0 0.0
    %181 = vmatpush1.msra.mxu0 0.0
    %182 = vmatprep.subr.mxu0 0.0
    %183 = vmatpush1.msra.mxu0 0.0
    %184 = vmatprep.subr.mxu0 0.0
    %185 = vmatpush1.msra.mxu0 0.0
    %186 = vmatprep.subr.mxu0 0.0
    %187 = vmatpush1.msra.mxu0 0.0
    %188 = vmatprep.mubr.f32.mxu0 0.0
    %189 = vmatmul.mubr.f32.gmra.mrb[0].mxu0 %v44
    %v190 = vpop.f32.mrb[0].mxu0
    %v191 = vadd.f32 0.0, %v190
    %v192 = vpop.f32.mrb[0].mxu0
    %193 = vmatprep.mubr.f32.mxu0 0.0
    %194 = vmatmul.mubr.f32.gmra.mrb[0].mxu0 %v45
    %v195 = vpop.f32.mrb[0].mxu0
    %v196 = vadd.f32 0.0, %v195
    %v197 = vpop.f32.mrb[0].mxu0
    %198 = vmatprep.mubr.f32.mxu0 0.0
    %199 = vmatmul.mubr.f32.gmra.mrb[0].mxu0 %v46
    %v200 = vpop.f32.mrb[0].mxu0
    %v201 = vadd.f32 0.0, %v200
    %v202 = vpop.f32.mrb[0].mxu0
    %203 = vmatprep.mubr.f32.mxu0 0.0
    %204 = vmatmul.mubr.f32.gmra.mrb[0].mxu0 %v47
    %v205 = vpop.f32.mrb[0].mxu0
    %v206 = vadd.f32 0.0, %v205
    %v207 = vpop.f32.mrb[0].mxu0
    %208 = vmatprep.mubr.f32.mxu0 0.0
    %209 = vmatmul.mubr.f32.gmra.mrb[0].mxu0 %v48
    %v210 = vpop.f32.mrb[0].mxu0
    %v211 = vadd.f32 0.0, %v210
    %v212 = vpop.f32.mrb[0].mxu0
    %213 = vmatprep.mubr.f32.mxu0 0.0
    %214 = vmatmul.mubr.f32.gmra.mrb[0].mxu0 %v49
    %v215 = vpop.f32.mrb[0].mxu0
    %v216 = vadd.f32 0.0, %v215
    %v217 = vpop.f32.mrb[0].mxu0
    %218 = vmatprep.mubr.f32.mxu0 0.0
    %219 = vmatmul.mubr.f32.gmra.mrb[0].mxu0 %v50
    %v220 = vpop.f32.mrb[0].mxu0
    %v221 = vadd.f32 0.0, %v220
    %v222 = vpop.f32.mrb[0].mxu0
    %223 = vmatprep.mubr.f32.mxu0 0.0
    %224 = vmatmul.mubr.f32.gmra.mrb[0].mxu0 %v51
    %v225 = vpop.f32.mrb[0].mxu0
    %v226 = vadd.f32 0.0, %v225
    %v227 = vpop.f32.mrb[0].mxu0
    %228 = vmatprep.mubr.f32.mxu0 0.0
    %229 = vmatmul.mubr.f32.gmra.mrb[0].mxu0 %v52
    %v230 = vpop.f32.mrb[0].mxu0
    %v231 = vadd.f32 0.0, %v230
    %v232 = vpop.f32.mrb[0].mxu0
    %233 = vmatprep.mubr.f32.mxu0 0.0
    %234 = vmatmul.mubr.f32.gmra.mrb[0].mxu0 %v53
    %v235 = vpop.f32.mrb[0].mxu0
    %v236 = vadd.f32 0.0, %v235
    %v237 = vpop.f32.mrb[0].mxu0
    %238 = vmatprep.mubr.f32.mxu0 0.0
    %239 = vmatmul.mubr.f32.gmra.mrb[0].mxu0 %v54
    %v240 = vpop.f32.mrb[0].mxu0
    %v241 = vadd.f32 0.0, %v240
    %v242 = vpop.f32.mrb[0].mxu0
    %243 = vmatprep.mubr.f32.mxu0 0.0
    %244 = vmatmul.mubr.f32.gmra.mrb[0].mxu0 %v55
    %v245 = vpop.f32.mrb[0].mxu0
    %v246 = vadd.f32 0.0, %v245
    %v247 = vpop.f32.mrb[0].mxu0
    %248 = vmatprep.mubr.f32.mxu0 0.0
    %249 = vmatmul.mubr.f32.gmra.mrb[0].mxu0 %v56
    %v250 = vpop.f32.mrb[0].mxu0
    %v251 = vadd.f32 0.0, %v250
    %v252 = vpop.f32.mrb[0].mxu0
    %253 = vmatprep.mubr.f32.mxu0 0.0
    %254 = vmatmul.mubr.f32.gmra.mrb[0].mxu0 %v57
    %v255 = vpop.f32.mrb[0].mxu0
    %v256 = vadd.f32 0.0, %v255
    %v257 = vpop.f32.mrb[0].mxu0
    %258 = vmatprep.mubr.f32.mxu0 0.0
    %259 = vmatmul.mubr.f32.gmra.mrb[0].mxu0 %v58
    %v260 = vpop.f32.mrb[0].mxu0
    %v261 = vadd.f32 0.0, %v260
    %v262 = vpop.f32.mrb[0].mxu0
    %263 = vmatprep.mubr.f32.mxu0 0.0
    %264 = vmatmul.mubr.f32.gmra.mrb[0].mxu0 %v59
    %v265 = vpop.f32.mrb[0].mxu0
    %v266 = vadd.f32 0.0, %v265
    %v267 = vpop.f32.mrb[0].mxu0
    %268 = vmatprep.mubr.f32.mxu0 0.0
    %269 = vmatmul.mubr.f32.gmra.mrb[0].mxu0 %v60
    %v270 = vpop.f32.mrb[0].mxu0
    %v271 = vadd.f32 0.0, %v270
    %v272 = vpop.f32.mrb[0].mxu0
    %273 = vmatprep.mubr.f32.mxu0 0.0
    %274 = vmatmul.mubr.f32.gmra.mrb[0].mxu0 %v61
    %v275 = vpop.f32.mrb[0].mxu0
    %v276 = vadd.f32 0.0, %v275
    %v277 = vpop.f32.mrb[0].mxu0
    %278 = vmatprep.mubr.f32.mxu0 0.0
    %279 = vmatmul.mubr.f32.gmra.mrb[0].mxu0 %v62
    %v280 = vpop.f32.mrb[0].mxu0
    %v281 = vadd.f32 0.0, %v280
    %v282 = vpop.f32.mrb[0].mxu0
    %283 = vmatprep.mubr.f32.mxu0 0.0
    %284 = vmatmul.mubr.f32.gmra.mrb[0].mxu0 %v63
    %v285 = vpop.f32.mrb[0].mxu0
    %v286 = vadd.f32 0.0, %v285
    %v287 = vpop.f32.mrb[0].mxu0
    %288 = vmatprep.mubr.f32.mxu0 0.0
    %289 = vmatmul.mubr.f32.gmra.mrb[0].mxu0 %v64
    %v290 = vpop.f32.mrb[0].mxu0
    %v291 = vadd.f32 0.0, %v290
    %v292 = vpop.f32.mrb[0].mxu0
    %293 = vmatprep.mubr.f32.mxu0 0.0
    %294 = vmatmul.mubr.f32.gmra.mrb[0].mxu0 %v65
    %v295 = vpop.f32.mrb[0].mxu0
    %v296 = vadd.f32 0.0, %v295
    %v297 = vpop.f32.mrb[0].mxu0
    %298 = vmatprep.mubr.f32.mxu0 0.0
    %299 = vmatmul.mubr.f32.gmra.mrb[0].mxu0 %v66
    %v300 = vpop.f32.mrb[0].mxu0
    %v301 = vadd.f32 0.0, %v300
    %v302 = vpop.f32.mrb[0].mxu0
    %303 = vmatprep.mubr.f32.mxu0 0.0
    %304 = vmatmul.mubr.f32.gmra.mrb[0].mxu0 %v67
    %v305 = vpop.f32.mrb[0].mxu0
    %v306 = vadd.f32 0.0, %v305
    %v307 = vpop.f32.mrb[0].mxu0
    %308 = vmatprep.mubr.f32.mxu0 0.0
    %309 = vmatmul.mubr.f32.gmra.mrb[0].mxu0 %v68
    %v310 = vpop.f32.mrb[0].mxu0
    %v311 = vadd.f32 0.0, %v310
    %v312 = vpop.f32.mrb[0].mxu0
    %313 = vmatprep.mubr.f32.mxu0 0.0
    %314 = vmatmul.mubr.f32.gmra.mrb[0].mxu0 %v69
    %v315 = vpop.f32.mrb[0].mxu0
    %v316 = vadd.f32 0.0, %v315
    %v317 = vpop.f32.mrb[0].mxu0
    %318 = vmatprep.mubr.f32.mxu0 0.0
    %319 = vmatmul.mubr.f32.gmra.mrb[0].mxu0 %v70
    %v320 = vpop.f32.mrb[0].mxu0
    %v321 = vadd.f32 0.0, %v320
    %v322 = vpop.f32.mrb[0].mxu0
    %323 = vmatprep.mubr.f32.mxu0 0.0
    %324 = vmatmul.mubr.f32.gmra.mrb[0].mxu0 %v71
    %v325 = vpop.f32.mrb[0].mxu0
    %v326 = vadd.f32 0.0, %v325
    %v327 = vpop.f32.mrb[0].mxu0
    %328 = vmatprep.mubr.f32.mxu0 0.0
    %329 = vmatmul.mubr.f32.gmra.mrb[0].mxu0 %v72
    %v330 = vpop.f32.mrb[0].mxu0
    %v331 = vadd.f32 0.0, %v330
    %v332 = vpop.f32.mrb[0].mxu0
    %333 = vmatprep.mubr.f32.mxu0 0.0
    %334 = vmatmul.mubr.f32.gmra.mrb[0].mxu0 %v73
    %v335 = vpop.f32.mrb[0].mxu0
    %v336 = vadd.f32 0.0, %v335
    %v337 = vpop.f32.mrb[0].mxu0
    %338 = vmatprep.mubr.f32.mxu0 0.0
    %339 = vmatmul.mubr.f32.gmra.mrb[0].mxu0 %v74
    %v340 = vpop.f32.mrb[0].mxu0
    %v341 = vadd.f32 0.0, %v340
    %v342 = vpop.f32.mrb[0].mxu0
    %343 = vmatprep.mubr.f32.mxu0 0.0
    %344 = vmatmul.mubr.f32.gmra.mrb[0].mxu0 %v75
    %v345 = vpop.f32.mrb[0].mxu0
    %v346 = vadd.f32 0.0, %v345
    %v347 = vpop.f32.mrb[0].mxu0
    %348 = vmatprep.mubr.f32.mxu0 0.0
    %349 = vmatmul.mubr.f32.gmra.mrb[0].mxu0 %v76
    %v350 = vpop.f32.mrb[0].mxu0
    %v351 = vadd.f32 0.0, %v350
    %v352 = vpop.f32.mrb[0].mxu0
    %353 = vmatprep.mubr.f32.mxu0 0.0
    %354 = vmatmul.mubr.f32.gmra.mrb[0].mxu0 %v77
    %v355 = vpop.f32.mrb[0].mxu0
    %v356 = vadd.f32 0.0, %v355
    %v357 = vpop.f32.mrb[0].mxu0
    %358 = vmatprep.mubr.f32.mxu0 0.0
    %359 = vmatmul.mubr.f32.gmra.mrb[0].mxu0 %v78
    %v360 = vpop.f32.mrb[0].mxu0
    %v361 = vadd.f32 0.0, %v360
    %v362 = vpop.f32.mrb[0].mxu0
    %363 = vmatprep.mubr.f32.mxu0 0.0
    %364 = vmatmul.mubr.f32.gmra.mrb[0].mxu0 %v79
    %v365 = vpop.f32.mrb[0].mxu0
    %v366 = vadd.f32 0.0, %v365
    %v367 = vpop.f32.mrb[0].mxu0
    %368 = vmatprep.mubr.f32.mxu0 0.0
    %369 = vmatmul.mubr.f32.gmra.mrb[0].mxu0 %v80
    %v370 = vpop.f32.mrb[0].mxu0
    %v371 = vadd.f32 0.0, %v370
    %v372 = vpop.f32.mrb[0].mxu0
    %373 = vmatprep.mubr.f32.mxu0 0.0
    %374 = vmatmul.mubr.f32.gmra.mrb[0].mxu0 %v81
    %v375 = vpop.f32.mrb[0].mxu0
    %v376 = vadd.f32 0.0, %v375
    %v377 = vpop.f32.mrb[0].mxu0
    %378 = vmatprep.mubr.f32.mxu0 0.0
    %379 = vmatmul.mubr.f32.gmra.mrb[0].mxu0 %v82
    %v380 = vpop.f32.mrb[0].mxu0
    %v381 = vadd.f32 0.0, %v380
    %v382 = vpop.f32.mrb[0].mxu0
    %383 = vmatprep.mubr.f32.mxu0 0.0
    %384 = vmatmul.mubr.f32.gmra.mrb[0].mxu0 %v83
    %v385 = vpop.f32.mrb[0].mxu0
    %v386 = vadd.f32 0.0, %v385
    %v387 = vpop.f32.mrb[0].mxu0
    %388 = vmatprep.mubr.f32.mxu0 0.0
    %389 = vmatmul.mubr.f32.gmra.mrb[0].mxu0 %v84
    %v390 = vpop.f32.mrb[0].mxu0
    %v391 = vadd.f32 0.0, %v390
    %v392 = vpop.f32.mrb[0].mxu0
    %393 = vmatprep.mubr.f32.mxu0 0.0
    %394 = vmatmul.mubr.f32.gmra.mrb[0].mxu0 %v85
    %v395 = vpop.f32.mrb[0].mxu0
    %v396 = vadd.f32 0.0, %v395
    %v397 = vpop.f32.mrb[0].mxu0
    %398 = vmatprep.mubr.f32.mxu0 0.0
    %399 = vmatmul.mubr.f32.gmra.mrb[0].mxu0 %v86
    %v400 = vpop.f32.mrb[0].mxu0
    %v401 = vadd.f32 0.0, %v400
    %v402 = vpop.f32.mrb[0].mxu0
    %403 = vmatprep.mubr.f32.mxu0 0.0
    %404 = vmatmul.mubr.f32.gmra.mrb[0].mxu0 %v87
    %v405 = vpop.f32.mrb[0].mxu0
    %v406 = vadd.f32 0.0, %v405
    %v407 = vpop.f32.mrb[0].mxu0
    %408 = vmatprep.mubr.f32.mxu0 0.0
    %409 = vmatmul.mubr.f32.gmra.mrb[0].mxu0 %v88
    %v410 = vpop.f32.mrb[0].mxu0
    %v411 = vadd.f32 0.0, %v410
    %v412 = vpop.f32.mrb[0].mxu0
    %413 = vmatprep.mubr.f32.mxu0 0.0
    %414 = vmatmul.mubr.f32.gmra.mrb[0].mxu0 %v89
    %v415 = vpop.f32.mrb[0].mxu0
    %v416 = vadd.f32 0.0, %v415
    %v417 = vpop.f32.mrb[0].mxu0
    %418 = vmatprep.mubr.f32.mxu0 0.0
    %419 = vmatmul.mubr.f32.gmra.mrb[0].mxu0 %v90
    %v420 = vpop.f32.mrb[0].mxu0
    %v421 = vadd.f32 0.0, %v420
    %v422 = vpop.f32.mrb[0].mxu0
    %423 = vmatprep.mubr.f32.mxu0 0.0
    %424 = vmatmul.mubr.f32.gmra.mrb[0].mxu0 %v91
    %v425 = vpop.f32.mrb[0].mxu0
    %v426 = vadd.f32 0.0, %v425
    %v427 = vpop.f32.mrb[0].mxu0
    %428 = vmatprep.mubr.f32.mxu0 0.0
    %429 = vmatmul.mubr.f32.gmra.mrb[0].mxu0 %v92
    %v430 = vpop.f32.mrb[0].mxu0
    %v431 = vadd.f32 0.0, %v430
    %v432 = vpop.f32.mrb[0].mxu0
    %433 = vmatprep.mubr.f32.mxu0 0.0
    %434 = vmatmul.mubr.f32.gmra.mrb[0].mxu0 %v93
    %v435 = vpop.f32.mrb[0].mxu0
    %v436 = vadd.f32 0.0, %v435
    %v437 = vpop.f32.mrb[0].mxu0
    %438 = vmatprep.mubr.f32.mxu0 0.0
    %439 = vmatmul.mubr.f32.gmra.mrb[0].mxu0 %v94
    %v440 = vpop.f32.mrb[0].mxu0
    %v441 = vadd.f32 0.0, %v440
    %v442 = vpop.f32.mrb[0].mxu0
    %443 = vmatprep.mubr.f32.mxu0 0.0
    %444 = vmatmul.mubr.f32.gmra.mrb[0].mxu0 %v95
    %v445 = vpop.f32.mrb[0].mxu0
    %v446 = vadd.f32 0.0, %v445
    %v447 = vpop.f32.mrb[0].mxu0
    %448 = vmatprep.mubr.f32.mxu0 0.0
    %449 = vmatmul.mubr.f32.gmra.mrb[0].mxu0 %v96
    %v450 = vpop.f32.mrb[0].mxu0
    %v451 = vadd.f32 0.0, %v450
    %v452 = vpop.f32.mrb[0].mxu0
    %453 = vmatprep.mubr.f32.mxu0 0.0
    %454 = vmatmul.mubr.f32.gmra.mrb[0].mxu0 %v97
    %v455 = vpop.f32.mrb[0].mxu0
    %v456 = vadd.f32 0.0, %v455
    %v457 = vpop.f32.mrb[0].mxu0
    %458 = vmatprep.mubr.f32.mxu0 0.0
    %459 = vmatmul.mubr.f32.gmra.mrb[0].mxu0 %v98
    %v460 = vpop.f32.mrb[0].mxu0
    %v461 = vadd.f32 0.0, %v460
    %v462 = vpop.f32.mrb[0].mxu0
    %463 = vmatprep.mubr.f32.mxu0 0.0
    %464 = vmatmul.mubr.f32.gmra.mrb[0].mxu0 %v99
    %v465 = vpop.f32.mrb[0].mxu0
    %v466 = vadd.f32 0.0, %v465
    %v467 = vpop.f32.mrb[0].mxu0
    %468 = vmatprep.mubr.f32.mxu0 0.0
    %469 = vmatmul.mubr.f32.gmra.mrb[0].mxu0 %v100
    %v470 = vpop.f32.mrb[0].mxu0
    %v471 = vadd.f32 0.0, %v470
    %v472 = vpop.f32.mrb[0].mxu0
    %473 = vmatprep.mubr.f32.mxu0 0.0
    %474 = vmatmul.mubr.f32.gmra.mrb[0].mxu0 %v101
    %v475 = vpop.f32.mrb[0].mxu0
    %v476 = vadd.f32 0.0, %v475
    %v477 = vpop.f32.mrb[0].mxu0
    %478 = vmatprep.mubr.f32.mxu0 0.0
    %479 = vmatmul.mubr.f32.gmra.mrb[0].mxu0 %v102
    %v480 = vpop.f32.mrb[0].mxu0
    %v481 = vadd.f32 0.0, %v480
    %v482 = vpop.f32.mrb[0].mxu0
    %483 = vmatprep.mubr.f32.mxu0 0.0
    %484 = vmatmul.mubr.f32.gmra.mrb[0].mxu0 %v103
    %v485 = vpop.f32.mrb[0].mxu0
    %v486 = vadd.f32 0.0, %v485
    %v487 = vpop.f32.mrb[0].mxu0
    %488 = vmatprep.mubr.f32.mxu0 0.0
    %489 = vmatmul.mubr.f32.gmra.mrb[0].mxu0 %v104
    %v490 = vpop.f32.mrb[0].mxu0
    %v491 = vadd.f32 0.0, %v490
    %v492 = vpop.f32.mrb[0].mxu0
    %493 = vmatprep.mubr.f32.mxu0 0.0
    %494 = vmatmul.mubr.f32.gmra.mrb[0].mxu0 %v105
    %v495 = vpop.f32.mrb[0].mxu0
    %v496 = vadd.f32 0.0, %v495
    %v497 = vpop.f32.mrb[0].mxu0
    %498 = vmatprep.mubr.f32.mxu0 0.0
    %499 = vmatmul.mubr.f32.gmra.mrb[0].mxu0 %v106
    %v500 = vpop.f32.mrb[0].mxu0
    %v501 = vadd.f32 0.0, %v500
    %v502 = vpop.f32.mrb[0].mxu0
    %503 = vmatprep.mubr.f32.mxu0 0.0
    %504 = vmatmul.mubr.f32.gmra.mrb[0].mxu0 %v107
    %v505 = vpop.f32.mrb[0].mxu0
    %v506 = vadd.f32 0.0, %v505
    %v507 = vpop.f32.mrb[0].mxu0
    %508 = vdwg.mxu0
    %509 = vst [vmem:[#allocation7] sm:$0xff] %v191
    %510 = vst [vmem:[#allocation7 + $0x8] sm:$0xff] %v196
    %511 = vst [vmem:[#allocation7 + $0x10] sm:$0xff] %v201
    %512 = vst [vmem:[#allocation7 + $0x18] sm:$0xff] %v206
    %513 = vst [vmem:[#allocation7 + $0x20] sm:$0xff] %v211
    %514 = vst [vmem:[#allocation7 + $0x28] sm:$0xff] %v216
    %515 = vst [vmem:[#allocation7 + $0x30] sm:$0xff] %v221
    %516 = vst [vmem:[#allocation7 + $0x38] sm:$0xff] %v226
    %517 = vst [vmem:[#allocation7 + $0x40] sm:$0xff] %v231
    %518 = vst [vmem:[#allocation7 + $0x48] sm:$0xff] %v236
    %519 = vst [vmem:[#allocation7 + $0x50] sm:$0xff] %v241
    %520 = vst [vmem:[#allocation7 + $0x58] sm:$0xff] %v246
    %521 = vst [vmem:[#allocation7 + $0x60] sm:$0xff] %v251
    %522 = vst [vmem:[#allocation7 + $0x68] sm:$0xff] %v256
    %523 = vst [vmem:[#allocation7 + $0x70] sm:$0xff] %v261
    %524 = vst [vmem:[#allocation7 + $0x78] sm:$0xff] %v266
    %525 = vst [vmem:[#allocation7 + $0x80] sm:$0xff] %v271
    %526 = vst [vmem:[#allocation7 + $0x88] sm:$0xff] %v276
    %527 = vst [vmem:[#allocation7 + $0x90] sm:$0xff] %v281
    %528 = vst [vmem:[#allocation7 + $0x98] sm:$0xff] %v286
    %529 = vst [vmem:[#allocation7 + $0xa0] sm:$0xff] %v291
    %530 = vst [vmem:[#allocation7 + $0xa8] sm:$0xff] %v296
    %531 = vst [vmem:[#allocation7 + $0xb0] sm:$0xff] %v301
    %532 = vst [vmem:[#allocation7 + $0xb8] sm:$0xff] %v306
    %533 = vst [vmem:[#allocation7 + $0xc0] sm:$0xff] %v311
    %534 = vst [vmem:[#allocation7 + $0xc8] sm:$0xff] %v316
    %535 = vst [vmem:[#allocation7 + $0xd0] sm:$0xff] %v321
    %536 = vst [vmem:[#allocation7 + $0xd8] sm:$0xff] %v326
    %537 = vst [vmem:[#allocation7 + $0xe0] sm:$0xff] %v331
    %538 = vst [vmem:[#allocation7 + $0xe8] sm:$0xff] %v336
    %539 = vst [vmem:[#allocation7 + $0xf0] sm:$0xff] %v341
    %540 = vst [vmem:[#allocation7 + $0xf8] sm:$0xff] %v346
    %541 = vst [vmem:[#allocation7 + $0x100] sm:$0xff] %v351
    %542 = vst [vmem:[#allocation7 + $0x108] sm:$0xff] %v356
    %543 = vst [vmem:[#allocation7 + $0x110] sm:$0xff] %v361
    %544 = vst [vmem:[#allocation7 + $0x118] sm:$0xff] %v366
    %545 = vst [vmem:[#allocation7 + $0x120] sm:$0xff] %v371
    %546 = vst [vmem:[#allocation7 + $0x128] sm:$0xff] %v376
    %547 = vst [vmem:[#allocation7 + $0x130] sm:$0xff] %v381
    %548 = vst [vmem:[#allocation7 + $0x138] sm:$0xff] %v386
    %549 = vst [vmem:[#allocation7 + $0x140] sm:$0xff] %v391
    %550 = vst [vmem:[#allocation7 + $0x148] sm:$0xff] %v396
    %551 = vst [vmem:[#allocation7 + $0x150] sm:$0xff] %v401
    %552 = vst [vmem:[#allocation7 + $0x158] sm:$0xff] %v406
    %553 = vst [vmem:[#allocation7 + $0x160] sm:$0xff] %v411
    %554 = vst [vmem:[#allocation7 + $0x168] sm:$0xff] %v416
    %555 = vst [vmem:[#allocation7 + $0x170] sm:$0xff] %v421
    %556 = vst [vmem:[#allocation7 + $0x178] sm:$0xff] %v426
    %557 = vst [vmem:[#allocation7 + $0x180] sm:$0xff] %v431
    %558 = vst [vmem:[#allocation7 + $0x188] sm:$0xff] %v436
    %559 = vst [vmem:[#allocation7 + $0x190] sm:$0xff] %v441
    %560 = vst [vmem:[#allocation7 + $0x198] sm:$0xff] %v446
    %561 = vst [vmem:[#allocation7 + $0x1a0] sm:$0xff] %v451
    %562 = vst [vmem:[#allocation7 + $0x1a8] sm:$0xff] %v456
    %563 = vst [vmem:[#allocation7 + $0x1b0] sm:$0xff] %v461
    %564 = vst [vmem:[#allocation7 + $0x1b8] sm:$0xff] %v466
    %565 = vst [vmem:[#allocation7 + $0x1c0] sm:$0xff] %v471
    %566 = vst [vmem:[#allocation7 + $0x1c8] sm:$0xff] %v476
    %567 = vst [vmem:[#allocation7 + $0x1d0] sm:$0xff] %v481
    %568 = vst [vmem:[#allocation7 + $0x1d8] sm:$0xff] %v486
    %569 = vst [vmem:[#allocation7 + $0x1e0] sm:$0xff] %v491
    %570 = vst [vmem:[#allocation7 + $0x1e8] sm:$0xff] %v496
    %571 = vst [vmem:[#allocation7 + $0x1f0] sm:$0xff] %v501
    %572 = vst [vmem:[#allocation7 + $0x1f8] sm:$0xff] %v506
    %v573 = vadd.f32 %v191, %v196
    %v574 = vadd.f32 %v573, %v201
    %v575 = vadd.f32 %v574, %v206
    %v576 = vadd.f32 %v575, %v211
    %v577 = vadd.f32 %v576, %v216
    %v578 = vadd.f32 %v577, %v221
    %v579 = vadd.f32 %v578, %v226
    %v580 = vadd.f32 %v579, %v231
    %v581 = vadd.f32 %v580, %v236
    %v582 = vadd.f32 %v581, %v241
    %v583 = vadd.f32 %v582, %v246
    %v584 = vadd.f32 %v583, %v251
    %v585 = vadd.f32 %v584, %v256
    %v586 = vadd.f32 %v585, %v261
    %v587 = vadd.f32 %v586, %v266
    %v588 = vadd.f32 %v587, %v271
    %v589 = vadd.f32 %v588, %v276
    %v590 = vadd.f32 %v589, %v281
    %v591 = vadd.f32 %v590, %v286
    %v592 = vadd.f32 %v591, %v291
    %v593 = vadd.f32 %v592, %v296
    %v594 = vadd.f32 %v593, %v301
    %v595 = vadd.f32 %v594, %v306
    %v596 = vadd.f32 %v595, %v311
    %v597 = vadd.f32 %v596, %v316
    %v598 = vadd.f32 %v597, %v321
    %v599 = vadd.f32 %v598, %v326
    %v600 = vadd.f32 %v599, %v331
    %v601 = vadd.f32 %v600, %v336
    %v602 = vadd.f32 %v601, %v341
    %v603 = vadd.f32 %v602, %v346
    %v604 = vadd.f32 %v603, %v351
    %v605 = vadd.f32 %v604, %v356
    %v606 = vadd.f32 %v605, %v361
    %v607 = vadd.f32 %v606, %v366
    %v608 = vadd.f32 %v607, %v371
    %v609 = vadd.f32 %v608, %v376
    %v610 = vadd.f32 %v609, %v381
    %v611 = vadd.f32 %v610, %v386
    %v612 = vadd.f32 %v611, %v391
    %v613 = vadd.f32 %v612, %v396
    %v614 = vadd.f32 %v613, %v401
    %v615 = vadd.f32 %v614, %v406
    %v616 = vadd.f32 %v615, %v411
    %v617 = vadd.f32 %v616, %v416
    %v618 = vadd.f32 %v617, %v421
    %v619 = vadd.f32 %v618, %v426
    %v620 = vadd.f32 %v619, %v431
    %v621 = vadd.f32 %v620, %v436
    %v622 = vadd.f32 %v621, %v441
    %v623 = vadd.f32 %v622, %v446
    %v624 = vadd.f32 %v623, %v451
    %v625 = vadd.f32 %v624, %v456
    %v626 = vadd.f32 %v625, %v461
    %v627 = vadd.f32 %v626, %v466
    %v628 = vadd.f32 %v627, %v471
    %v629 = vadd.f32 %v628, %v476
    %v630 = vadd.f32 %v629, %v481
    %v631 = vadd.f32 %v630, %v486
    %v632 = vadd.f32 %v631, %v491
    %v633 = vadd.f32 %v632, %v496
    %v634 = vadd.f32 %v633, %v501
    %v635 = vadd.f32 %v634, %v506
    %v636 = vrot.slane %v635, 4
    %v637 = vadd.f32 %v635, %v636
    %v638 = vrot.slane %v637, 2
    %v639 = vadd.f32 %v637, %v638
    %v640 = vrot.slane %v639, 1
    %v641 = vadd.f32 %v639, %v640
    %642 = vst [vmem:[#allocation8] sm:$0x1] %v641
    %v643 = vmul.f32 %v191, %v191
    %v644 = vmul.f32 %v196, %v196
    %v645 = vmul.f32 %v201, %v201
    %v646 = vmul.f32 %v206, %v206
    %v647 = vmul.f32 %v211, %v211
    %v648 = vmul.f32 %v216, %v216
    %v649 = vmul.f32 %v221, %v221
    %v650 = vmul.f32 %v226, %v226
    %v651 = vmul.f32 %v231, %v231
    %v652 = vmul.f32 %v236, %v236
    %v653 = vmul.f32 %v241, %v241
    %v654 = vmul.f32 %v246, %v246
    %v655 = vmul.f32 %v251, %v251
    %v656 = vmul.f32 %v256, %v256
    %v657 = vmul.f32 %v261, %v261
    %v658 = vmul.f32 %v266, %v266
    %v659 = vmul.f32 %v271, %v271
    %v660 = vmul.f32 %v276, %v276
    %v661 = vmul.f32 %v281, %v281
    %v662 = vmul.f32 %v286, %v286
    %v663 = vmul.f32 %v291, %v291
    %v664 = vmul.f32 %v296, %v296
    %v665 = vmul.f32 %v301, %v301
    %v666 = vmul.f32 %v306, %v306
    %v667 = vmul.f32 %v311, %v311
    %v668 = vmul.f32 %v316, %v316
    %v669 = vmul.f32 %v321, %v321
    %v670 = vmul.f32 %v326, %v326
    %v671 = vmul.f32 %v331, %v331
    %v672 = vmul.f32 %v336, %v336
    %v673 = vmul.f32 %v341, %v341
    %v674 = vmul.f32 %v346, %v346
    %v675 = vmul.f32 %v351, %v351
    %v676 = vmul.f32 %v356, %v356
    %v677 = vmul.f32 %v361, %v361
    %v678 = vmul.f32 %v366, %v366
    %v679 = vmul.f32 %v371, %v371
    %v680 = vmul.f32 %v376, %v376
    %v681 = vmul.f32 %v381, %v381
    %v682 = vmul.f32 %v386, %v386
    %v683 = vmul.f32 %v391, %v391
    %v684 = vmul.f32 %v396, %v396
    %v685 = vmul.f32 %v401, %v401
    %v686 = vmul.f32 %v406, %v406
    %v687 = vmul.f32 %v411, %v411
    %v688 = vmul.f32 %v416, %v416
    %v689 = vmul.f32 %v421, %v421
    %v690 = vmul.f32 %v426, %v426
    %v691 = vmul.f32 %v431, %v431
    %v692 = vmul.f32 %v436, %v436
    %v693 = vmul.f32 %v441, %v441
    %v694 = vmul.f32 %v446, %v446
    %v695 = vmul.f32 %v451, %v451
    %v696 = vmul.f32 %v456, %v456
    %v697 = vmul.f32 %v461, %v461
    %v698 = vmul.f32 %v466, %v466
    %v699 = vmul.f32 %v471, %v471
    %v700 = vmul.f32 %v476, %v476
    %v701 = vmul.f32 %v481, %v481
    %v702 = vmul.f32 %v486, %v486
    %v703 = vmul.f32 %v491, %v491
    %v704 = vmul.f32 %v496, %v496
    %v705 = vmul.f32 %v501, %v501
    %v706 = vmul.f32 %v506, %v506
    %v707 = vadd.f32 %v643, %v644
    %v708 = vadd.f32 %v707, %v645
    %v709 = vadd.f32 %v708, %v646
    %v710 = vadd.f32 %v709, %v647
    %v711 = vadd.f32 %v710, %v648
    %v712 = vadd.f32 %v711, %v649
    %v713 = vadd.f32 %v712, %v650
    %v714 = vadd.f32 %v713, %v651
    %v715 = vadd.f32 %v714, %v652
    %v716 = vadd.f32 %v715, %v653
    %v717 = vadd.f32 %v716, %v654
    %v718 = vadd.f32 %v717, %v655
    %v719 = vadd.f32 %v718, %v656
    %v720 = vadd.f32 %v719, %v657
    %v721 = vadd.f32 %v720, %v658
    %v722 = vadd.f32 %v721, %v659
    %v723 = vadd.f32 %v722, %v660
    %v724 = vadd.f32 %v723, %v661
    %v725 = vadd.f32 %v724, %v662
    %v726 = vadd.f32 %v725, %v663
    %v727 = vadd.f32 %v726, %v664
    %v728 = vadd.f32 %v727, %v665
    %v729 = vadd.f32 %v728, %v666
    %v730 = vadd.f32 %v729, %v667
    %v731 = vadd.f32 %v730, %v668
    %v732 = vadd.f32 %v731, %v669
    %v733 = vadd.f32 %v732, %v670
    %v734 = vadd.f32 %v733, %v671
    %v735 = vadd.f32 %v734, %v672
    %v736 = vadd.f32 %v735, %v673
    %v737 = vadd.f32 %v736, %v674
    %v738 = vadd.f32 %v737, %v675
    %v739 = vadd.f32 %v738, %v676
    %v740 = vadd.f32 %v739, %v677
    %v741 = vadd.f32 %v740, %v678
    %v742 = vadd.f32 %v741, %v679
    %v743 = vadd.f32 %v742, %v680
    %v744 = vadd.f32 %v743, %v681
    %v745 = vadd.f32 %v744, %v682
    %v746 = vadd.f32 %v745, %v683
    %v747 = vadd.f32 %v746, %v684
    %v748 = vadd.f32 %v747, %v685
    %v749 = vadd.f32 %v748, %v686
    %v750 = vadd.f32 %v749, %v687
    %v751 = vadd.f32 %v750, %v688
    %v752 = vadd.f32 %v751, %v689
    %v753 = vadd.f32 %v752, %v690
    %v754 = vadd.f32 %v753, %v691
    %v755 = vadd.f32 %v754, %v692
    %v756 = vadd.f32 %v755, %v693
    %v757 = vadd.f32 %v756, %v694
    %v758 = vadd.f32 %v757, %v695
    %v759 = vadd.f32 %v758, %v696
    %v760 = vadd.f32 %v759, %v697
    %v761 = vadd.f32 %v760, %v698
    %v762 = vadd.f32 %v761, %v699
    %v763 = vadd.f32 %v762, %v700
    %v764 = vadd.f32 %v763, %v701
    %v765 = vadd.f32 %v764, %v702
    %v766 = vadd.f32 %v765, %v703
    %v767 = vadd.f32 %v766, %v704
    %v768 = vadd.f32 %v767, %v705
    %v769 = vadd.f32 %v768, %v706
    %v770 = vrot.slane %v769, 4
    %v771 = vadd.f32 %v769, %v770
    %v772 = vrot.slane %v771, 2
    %v773 = vadd.f32 %v771, %v772
    %v774 = vrot.slane %v773, 1
    %v775 = vadd.f32 %v773, %v774
    %776 = vst [vmem:[#allocation10] sm:$0x1] %v775
    // Predicated region
    $region18: #{tpu_custom_call.1} parent=1 // pred_check
      _
    $region19: #{tpu_custom_call.1} parent=1 // pred_check_branch
      %778 = sbr.rel (0) target = $region21
    $region20: #{tpu_custom_call.1} parent=1 // pred_region
      %s780 = ssub.s32 8192, 8192
      %781 = vsyncadd [#allocation4], %s780
      %s782 = sshll.u32 [#allocation7], 4
      %s783 = int_to_ptr.vmem [resolvable:$true] %s782
      %788 = dma.vmem_to_hbm [thread:$0]  %s783, 8192, %s2, [#allocation4], 128, 128, 8
    $region21: #{tpu_custom_call.1} parent=1 // pred_fallthru
      _
    // Predicated region
    $region22: #{tpu_custom_call.1} parent=1 // pred_check
      _
    $region23: #{tpu_custom_call.1} parent=1 // pred_check_branch
      %790 = sbr.rel (0) target = $region25
    $region24: #{tpu_custom_call.1} parent=1 // pred_region
      %s792 = ssub.s32 16, 16
      %793 = vsyncadd [#allocation9], %s792
      %s795 = sshll.u32 [#allocation8], 4
      %s796 = int_to_ptr.vmem [resolvable:$true] %s795
      %798 = dma.vmem_to_hbm [thread:$0]  %s796, 16, %s3, [#allocation9]
    $region25: #{tpu_custom_call.1} parent=1 // pred_fallthru
      _
    // Predicated region
    $region26: #{tpu_custom_call.1} parent=1 // pred_check
      _
    $region27: #{tpu_custom_call.1} parent=1 // pred_check_branch
      %800 = sbr.rel (0) target = $region29
    $region28: #{tpu_custom_call.1} parent=1 // pred_region
      %s802 = ssub.s32 16, 16
      %803 = vsyncadd [#allocation9], %s802
      %s805 = sshll.u32 [#allocation10], 4
      %s806 = int_to_ptr.vmem [resolvable:$true] %s805
      %808 = dma.vmem_to_hbm [thread:$0]  %s806, 16, %s4, [#allocation9]
    $region29: #{tpu_custom_call.1} parent=1 // pred_fallthru
      _
    // Predicated region
    $region30: #{tpu_custom_call.1} parent=1 // pred_check
      _
    $region31: #{tpu_custom_call.1} parent=1 // pred_check_branch
      %810 = sbr.rel (0) target = $region33
    $region32: #{tpu_custom_call.1} parent=1 // pred_region
      %811 = dma.done [#allocation4], 8192
    $region33: #{tpu_custom_call.1} parent=1 // pred_fallthru
      _
    // Predicated region
    $region34: #{tpu_custom_call.1} parent=1 // pred_check
      _
    $region35: #{tpu_custom_call.1} parent=1 // pred_check_branch
      %813 = sbr.rel (0) target = $region37
    $region36: #{tpu_custom_call.1} parent=1 // pred_region
      %814 = dma.done [#allocation9], 16
    $region37: #{tpu_custom_call.1} parent=1 // pred_fallthru
      _
    // Predicated region
    $region38: #{tpu_custom_call.1} parent=1 // pred_check
      _
    $region39: #{tpu_custom_call.1} parent=1 // pred_check_branch
      %816 = sbr.rel (0) target = $region41
    $region40: #{tpu_custom_call.1} parent=1 // pred_region
      %817 = dma.done [#allocation9], 16
    $region41: #{tpu_custom_call.1} parent=1 // pred_fallthru
      _
    %818 = vsyncpa [#allocation3], 1
    %819 = vsyncpa [#allocation6], 1
    %820 = vsyncpa [#allocation4], 1
    %821 = vsyncpa [#allocation9], 1

</llo_original>
